<compile_context>
chip_gen: v7x
topology: tpu7x:2x2x1
jax: 0.10.0
libtpu: 0.0.40
codegen_flags: <defaults>
</compile_context>

<pallas_src>
import math
from functools import partial

import jax
import jax.numpy as jnp
from jax.experimental import pallas as pl
from jax.experimental.pallas import tpu as pltpu

_LANE = 128


# ----------------------------- kernels ------------------------------------- #

def _lora_kernel_vpu(x_ref, a_ref, b_ref, o_ref, *, scaling, rank):
    """rank-term outer-product update on the VPU, full f32.

    ~2*rank VALU ops/element (rank=4 -> ~8), stays hidden under the HBM DMA,
    leaves the MXU free, and keeps the delta in f32 (no bf16 truncation).
    """
    a = a_ref[...].astype(jnp.float32) * scaling      # (tm, rank): scaling folded here
    b = b_ref[...].astype(jnp.float32)                # (rank, tn)
    acc = x_ref[...].astype(jnp.float32)              # (tm, tn)
    for k in range(rank):                             # static unroll, rank is small
        acc = acc + a[:, k:k + 1] * b[k:k + 1, :]
    o_ref[...] = acc.astype(o_ref.dtype)


def _lora_kernel_mxu(x_ref, a_ref, b_ref, o_ref, *, scaling):
    """Single-pass bf16 MXU matmul with f32 accumulation (used for larger rank).

    Explicit bf16 casts pin the dot to exactly one MXU pass (never the
    multi-pass f32 path that would flip the kernel MXU-bound on v6e/v7x).
    """
    a_bf = (a_ref[...].astype(jnp.float32) * scaling).astype(jnp.bfloat16)
    b_bf = b_ref[...].astype(jnp.bfloat16)
    delta = jnp.dot(a_bf, b_bf, preferred_element_type=jnp.float32)
    o_ref[...] = (x_ref[...].astype(jnp.float32) + delta).astype(o_ref.dtype)


# ----------------------------- wrapper -------------------------------------- #

def _round_up(a, b):
    return ((a + b - 1) // b) * b


def _min_sublane(dtype):
    # Minimum second-to-last tile dim by element width (f32: 8, bf16: 16, i8/fp8: 32).
    return {4: 8, 2: 16, 1: 32}.get(jnp.dtype(dtype).itemsize, 8)


def _vmem_capacity_bytes():
    try:
        return int(pltpu.get_tpu_info().vmem_capacity_bytes)
    except Exception:
        return 64 << 20  # conservative fallback (v7x per-TC VMEM)


def lora_forward(x, lora_a, lora_b, lora_alpha=1.0, *, tm=None, tn=None,
                 vmem_limit_bytes=None, use_mxu=None, x_buffer_count=None,
                 donate_x=False):
    """X + lora_A @ lora_B * (lora_alpha / rank), tiled Pallas TPU kernel."""
    out_features, in_features = x.shape
    rank = lora_a.shape[1]
    assert rank > 0, f"Rank should be positive, got {rank}"
    assert lora_a.shape == (out_features, rank)
    assert lora_b.shape == (rank, in_features)
    scaling = float(lora_alpha) / float(rank)

    x_bytes = jnp.dtype(x.dtype).itemsize
    a_bytes = jnp.dtype(lora_a.dtype).itemsize
    b_bytes = jnp.dtype(lora_b.dtype).itemsize
    sub = max(_min_sublane(x.dtype), _min_sublane(lora_a.dtype))

    # ---- generation-aware tile target & scoped-VMEM cap --------------------
    phys_vmem = _vmem_capacity_bytes()
    if phys_vmem >= (100 << 20):          # 128 MiB parts (v5e / v6e)
        vmem_cap = 96 << 20
        target_tile_bytes = 8 << 20
    else:                                 # 64 MiB-per-TC parts (v7x)
        vmem_cap = 48 << 20
        target_tile_bytes = 6 << 20

    # ---- lane (last-axis) tile: lane-dense, large multiple of 128 ----------
    MAX_TN = 2048
    if tn is None:
        tn = in_features if in_features <= MAX_TN else MAX_TN
    assert tn == in_features or tn % 128 == 0, \
        "tn must be full extent or a multiple of 128"

    # ---- sublane tile: target-sized X tile, dtype-aware multiple -----------
    if tm is None:
        tm = max(sub, target_tile_bytes // max(tn * x_bytes, 1))
        tm = _round_up(tm, sub)
        if tm >= out_features:
            tm = out_features
        # Row axis always gets >= 2 blocks when possible so both v7x
        # TensorCores pull DMA regardless of which "parallel" axis Mosaic
        # shards (harmless on single-core v5e/v6e).
        if tm == out_features and out_features > sub:
            tm = min(out_features, _round_up(pl.cdiv(out_features, 2), sub))
    assert tm == out_features or tm % sub == 0, \
        "tm must be full extent or a multiple of the sublane minimum"

    grid = (pl.cdiv(out_features, tm), pl.cdiv(in_features, tn))

    # ---- explicit scoped-VMEM budget (padding-aware, counted once) ---------
    x_bufs = 2 if x_buffer_count is None else int(x_buffer_count)
    if vmem_limit_bytes is None:
        a_lane_pad = _round_up(rank, _LANE)                       # A pads rank -> 128 lanes
        b_sub_pad = _round_up(rank, _min_sublane(lora_b.dtype))   # B pads rank sublanes
        tile_bytes = (
            x_bufs * tm * tn * x_bytes        # X tiles (multi-buffered input)
            + 2 * tm * tn * x_bytes           # output tiles (double-buffered)
            + 2 * tm * a_lane_pad * a_bytes   # lora_A tiles (lane-padded)
            + 2 * b_sub_pad * tn * b_bytes    # lora_B tiles (sublane-padded)
        )
        vmem_limit_bytes = tile_bytes + (4 << 20)                 # headroom, once
        vmem_limit_bytes = max(32 << 20, min(vmem_limit_bytes, vmem_cap))

    # ---- compute path -------------------------------------------------------
    if use_mxu is None:
        use_mxu = rank > 8
    kernel = (partial(_lora_kernel_mxu, scaling=scaling) if use_mxu
              else partial(_lora_kernel_vpu, scaling=scaling, rank=rank))

    x_spec_kwargs = {}
    if x_bufs != 2:
        # Opt-in deeper input pipelining; confirm via xprof before keeping.
        x_spec_kwargs["pipeline_mode"] = pl.Buffered(x_bufs)

    M, N = out_features, in_features
    cost = pl.CostEstimate(
        flops=2 * M * N * rank + M * N,
        transcendentals=0,
        bytes_accessed=2 * M * N * x_bytes + M * rank * a_bytes + rank * N * b_bytes,
    )

    return pl.pallas_call(
        kernel,
        out_shape=jax.ShapeDtypeStruct((out_features, in_features), x.dtype),
        grid_spec=pltpu.PrefetchScalarGridSpec(
            num_scalar_prefetch=0,
            grid=grid,
            in_specs=[
                pl.BlockSpec((tm, tn), lambda i, j: (i, j), **x_spec_kwargs),  # X tile
                pl.BlockSpec((tm, rank), lambda i, j: (i, 0)),                 # lora_A rows
                pl.BlockSpec((rank, tn), lambda i, j: (0, j)),                 # lora_B cols
            ],
            out_specs=pl.BlockSpec((tm, tn), lambda i, j: (i, j)),
        ),
        compiler_params=pltpu.CompilerParams(
            dimension_semantics=("parallel", "parallel"),
            vmem_limit_bytes=int(vmem_limit_bytes),
        ),
        cost_estimate=cost,
        # Optionally overwrite X's buffer in place (halves HBM footprint for
        # multi-GB weights); off by default to match parametrization semantics.
        input_output_aliases=({0: 0} if donate_x else {}),
    )(x, lora_a, lora_b)


# ----------------------------- self-test ------------------------------------ #

if __name__ == "__main__":
    key = jax.random.PRNGKey(0)

    def make_inputs(k, out_features, in_features, rank):
        kx, ka, kb = jax.random.split(k, 3)
        x = jax.random.normal(kx, (out_features, in_features), dtype=jnp.float32)
        # lora_A: kaiming_uniform_(a=sqrt(5)) on (out_features, rank) -> bound sqrt(1/rank).
        bound = math.sqrt(1.0 / rank)
        lora_a = jax.random.uniform(
            ka, (out_features, rank), minval=-bound, maxval=bound, dtype=jnp.float32)
        # lora_B is zeros in __init__; use small random values so the delta
        # path is actually exercised (deterministic, in-script).
        lora_b = 0.01 * jax.random.normal(kb, (rank, in_features), dtype=jnp.float32)
        return x, lora_a, lora_b

    lora_alpha = 1.0
    k1, k2, k3 = jax.random.split(key, 3)

    # Case 1: small weight, default tiling (row axis auto-splits into 2 blocks),
    # rank=4 -> f32 VPU outer-product path.
    rank = 4
    out_features, in_features = 32, 256
    x, a, b = make_inputs(k1, out_features, in_features, rank)
    out = jax.block_until_ready(lora_forward(x, a, b, lora_alpha))
    ref = x + (a @ b) * (lora_alpha / rank)
    assert out.shape == x.shape and out.dtype == x.dtype
    assert jnp.allclose(out, ref, atol=1e-5, rtol=1e-5), "case 1 mismatch vs reference"

    # Case 2: non-divisible shapes with explicit tiles -> pl.cdiv grid with
    # padded/masked edge tiles (48 rows / tm=32, 320 cols / tn=256).
    out_features, in_features = 48, 320
    x, a, b = make_inputs(k2, out_features, in_features, rank)
    out = jax.block_until_ready(lora_forward(x, a, b, lora_alpha, tm=32, tn=256))
    ref = x + (a @ b) * (lora_alpha / rank)
    assert out.shape == x.shape and out.dtype == x.dtype
    assert jnp.allclose(out, ref, atol=1e-5, rtol=1e-5), "case 2 mismatch vs reference"

    # Case 3: larger rank (>8) -> single-pass bf16 MXU path with f32 accumulate.
    rank = 16
    out_features, in_features = 64, 384
    x, a, b = make_inputs(k3, out_features, in_features, rank)
    out = jax.block_until_ready(lora_forward(x, a, b, lora_alpha))
    ref = x + (a @ b) * (lora_alpha / rank)
    assert out.shape == x.shape and out.dtype == x.dtype
    assert jnp.allclose(out, ref, atol=1e-2, rtol=1e-2), "case 3 mismatch vs reference"

    print("KERNEL_OK")
</pallas_src>

<mosaic_0001>
module attributes {stable_mosaic.version = 11 : i64} {
  func.func @_lora_kernel_vpu(%arg0: i32, %arg1: i32, %arg2: memref<16x256xf32, #tpu.memory_space<vmem>>, %arg3: memref<16x4xf32, #tpu.memory_space<vmem>>, %arg4: memref<4x256xf32, #tpu.memory_space<vmem>>, %arg5: memref<16x256xf32, #tpu.memory_space<vmem>>) attributes {dimension_semantics = [#tpu.dimension_semantics<parallel>, #tpu.dimension_semantics<parallel>], iteration_bounds = array<i64: 2, 1>, scalar_prefetch = 0 : i64, scratch_operands = 0 : i64, tpu.core_type = #tpu.core_type<tc>, window_params = [{transform_indices = @transform_0, window_bounds = array<i64: 16, 256>}, {transform_indices = @transform_1, window_bounds = array<i64: 16, 4>}, {transform_indices = @transform_2, window_bounds = array<i64: 4, 256>}, {transform_indices = @transform_3, window_bounds = array<i64: 16, 256>}]} {
    %c0 = arith.constant 0 : index
    %c0_0 = arith.constant 0 : index
    %0 = vector.load %arg3[%c0, %c0_0] : memref<16x4xf32, #tpu.memory_space<vmem>>, vector<16x4xf32>
    %cst = arith.constant 2.500000e-01 : f32
    %1 = vector.broadcast %cst : f32 to vector<16x4xf32>
    %2 = arith.mulf %0, %1 : vector<16x4xf32>
    %c0_1 = arith.constant 0 : index
    %c0_2 = arith.constant 0 : index
    %3 = vector.load %arg4[%c0_1, %c0_2] : memref<4x256xf32, #tpu.memory_space<vmem>>, vector<4x256xf32>
    %c0_3 = arith.constant 0 : index
    %c0_4 = arith.constant 0 : index
    %4 = vector.load %arg2[%c0_3, %c0_4] : memref<16x256xf32, #tpu.memory_space<vmem>>, vector<16x256xf32>
    %5 = vector.extract_strided_slice %2 {offsets = [0, 0], sizes = [16, 1], strides = [1, 1]} : vector<16x4xf32> to vector<16x1xf32>
    %6 = vector.extract_strided_slice %3 {offsets = [0, 0], sizes = [1, 256], strides = [1, 1]} : vector<4x256xf32> to vector<1x256xf32>
    %7 = vector.broadcast %5 : vector<16x1xf32> to vector<16x256xf32>
    %8 = vector.broadcast %6 : vector<1x256xf32> to vector<16x256xf32>
    %9 = arith.mulf %7, %8 : vector<16x256xf32>
    %10 = arith.addf %4, %9 : vector<16x256xf32>
    %11 = vector.extract_strided_slice %2 {offsets = [0, 1], sizes = [16, 1], strides = [1, 1]} : vector<16x4xf32> to vector<16x1xf32>
    %12 = vector.extract_strided_slice %3 {offsets = [1, 0], sizes = [1, 256], strides = [1, 1]} : vector<4x256xf32> to vector<1x256xf32>
    %13 = vector.broadcast %11 : vector<16x1xf32> to vector<16x256xf32>
    %14 = vector.broadcast %12 : vector<1x256xf32> to vector<16x256xf32>
    %15 = arith.mulf %13, %14 : vector<16x256xf32>
    %16 = arith.addf %10, %15 : vector<16x256xf32>
    %17 = vector.extract_strided_slice %2 {offsets = [0, 2], sizes = [16, 1], strides = [1, 1]} : vector<16x4xf32> to vector<16x1xf32>
    %18 = vector.extract_strided_slice %3 {offsets = [2, 0], sizes = [1, 256], strides = [1, 1]} : vector<4x256xf32> to vector<1x256xf32>
    %19 = vector.broadcast %17 : vector<16x1xf32> to vector<16x256xf32>
    %20 = vector.broadcast %18 : vector<1x256xf32> to vector<16x256xf32>
    %21 = arith.mulf %19, %20 : vector<16x256xf32>
    %22 = arith.addf %16, %21 : vector<16x256xf32>
    %23 = vector.extract_strided_slice %2 {offsets = [0, 3], sizes = [16, 1], strides = [1, 1]} : vector<16x4xf32> to vector<16x1xf32>
    %24 = vector.extract_strided_slice %3 {offsets = [3, 0], sizes = [1, 256], strides = [1, 1]} : vector<4x256xf32> to vector<1x256xf32>
    %25 = vector.broadcast %23 : vector<16x1xf32> to vector<16x256xf32>
    %26 = vector.broadcast %24 : vector<1x256xf32> to vector<16x256xf32>
    %27 = arith.mulf %25, %26 : vector<16x256xf32>
    %28 = arith.addf %22, %27 : vector<16x256xf32>
    %c0_5 = arith.constant 0 : index
    %c0_6 = arith.constant 0 : index
    %29 = vector.load %arg5[%c0_5, %c0_6] : memref<16x256xf32, #tpu.memory_space<vmem>>, vector<16x256xf32>
    tpu.vector_store %arg5[%c0_5, %c0_6], %28 {strides = array<i32>} : memref<16x256xf32, #tpu.memory_space<vmem>>, vector<16x256xf32>,
    return
  }
  func.func @transform_0(%arg0: i32, %arg1: i32) -> (i32, i32) {
    %c0_i32 = arith.constant 0 : i32
    return %arg0, %arg1 : i32, i32
  }
  func.func @transform_1(%arg0: i32, %arg1: i32) -> (i32, i32) {
    %c0_i32 = arith.constant 0 : i32
    %c0_i32_0 = arith.constant 0 : i32
    return %arg0, %c0_i32 : i32, i32
  }
  func.func @transform_2(%arg0: i32, %arg1: i32) -> (i32, i32) {
    %c0_i32 = arith.constant 0 : i32
    %c0_i32_0 = arith.constant 0 : i32
    return %c0_i32, %arg1 : i32, i32
  }
  func.func @transform_3(%arg0: i32, %arg1: i32) -> (i32, i32) {
    %c0_i32 = arith.constant 0 : i32
    return %arg0, %arg1 : i32, i32
  }
}

</mosaic_0001>

<llo_original>
// kernel: tpu_custom_call.1
$region0: #{tpu_custom_call.1}
  #allocation0 [shape = 'u32[]', space=smem, size = 0x4, offset = 0x4, fixed_abs, tag = 'smem constant byte address 0x4 - core index']
  #allocation1 [shape = 'u32[144,128]{1,0:T(1,128)}', space=vmem, size = 0x12000, scoped, tag = 'internal scratch']
  %s0 = inlined_call_operand.hbm [shape: f32[32,256], index: 0, kind: input, shape index: {}]
  %s1 = inlined_call_operand.vmem [shape: f32[32,4], index: 1, kind: input, shape index: {}]
  %s2 = inlined_call_operand.vmem [shape: f32[4,256], index: 2, kind: input, shape index: {}]
  %s3 = inlined_call_operand.hbm [shape: f32[32,256], index: 3, kind: output, shape index: {}]
  %s4 = sld [smem:[#allocation0]]
  $region49: #{tpu_custom_call.1} parent=0
    _
  %s6 = ssub.s32 1, %s4
  %s7 = scalar_select 0, %s6, %s4
  $region1: #{tpu_custom_call.1} parent=0
    #allocation2 [shape = 'u8[32768]{0}', space=vmem, size = 0x8000, scoped, tag = 'input window, operand 0']
    #allocation3 [shape = 's32[2]{0}', space=sflag, size = 0x8, scoped, tag = 'scoped memory for tpu_custom_call.1']
    #allocation4 [shape = 's32[2]{0}', space=sflag, size = 0x8, scoped, tag = 'scoped memory for tpu_custom_call.1']
    #allocation5 [shape = 'u8[32768]{0}', space=vmem, size = 0x8000, scoped, tag = 'output window, operand 0']
    %8 = vsyncpa [#allocation3], 0
    %s9 = scalar_lea.sflag [#allocation3], 1
    %10 = vsyncpa %s9, 0
    %11 = vsyncpa [#allocation4], 0
    %s12 = scalar_lea.sflag [#allocation4], 1
    %13 = vsyncpa %s12, 0
    loop: start=0, step=1, limit=4
    $region2: #{tpu_custom_call.1} parent=1 // loop_pre_header
      _
    $region3: #{tpu_custom_call.1} parent=1 // loop_header
      %s15 = sphi 0, %s19
      %p16 = scmp.ge.s32.totalorder %s15, 4
      %s22 = sphi 0, %s34
      %s23 = sphi 0, %s30
      %s24 = sphi 0, %s22
      %s25 = sphi 0, %s23
      %s26 = sphi 0, %s24
      %s27 = sphi 0, %s25
      %s39 = sphi 0, %s41
      %s42 = sphi 0, %s39
      %s43 = sphi 0, %s42
      %s59 = sphi 0, %s43
      %s65 = sphi 0, %s67
      %s68 = sphi 0, %s65
      %s69 = sphi 0, %s68
      %s85 = sphi 0, %s69
      %s91 = sphi 0, %s93
      %s94 = sphi 0, %s91
      %s95 = sphi 0, %s94
      %s111 = sphi 0, %s95
      %s119 = sphi 0, %s121
      %s122 = sphi 0, %s119
      %s123 = sphi 0, %s122
      %s139 = sphi 0, %s123
    $region4: #{tpu_custom_call.1} parent=1 // loop_header_branch
      %18 = sbr.rel (%p16) target = $region8
    $region5: #{tpu_custom_call.1} parent=1 // loop_body
      %s20 = ssub.s32 %s15, 1
      %s21 = ssub.s32 %s15, 2
      %s28 = sadd.s32 1, %s23
      %p29 = scmp.ge.s32.totalorder %s28, 1
      %s30 = scalar_select %p29, 0, %s28
      %s31 = sadd.s32 1, %s22
      %s32 = scalar_select %p29, %s31, %s22
      %p33 = scmp.ge.s32.totalorder %s32, 2
      %s34 = scalar_select %p33, 0, %s32
      %s35 = ssub.s32 %s22, %s34
      %s36 = ssub.s32 %s23, %s30
      %s37 = sor.u32 %s35, %s36
      %p38 = scmp.eq.s32.totalorder %s37, 0
      %s40 = sadd.s32 %s39, 1
      %s41 = scalar_select %p38, %s39, %s40
      %p44 = pneg %p38
      %p45 = scmp.eq.s32.totalorder %s15, 1
      %p46 = por %p44, %p45
      %p47 = scmp.ne.s32.totalorder %s39, %s42
      %p48 = scmp.eq.s32.totalorder %s15, 0
      %p49 = por %p47, %p48
      %p50 = scmp.ne.s32.totalorder %s39, %s42
      %p51 = scmp.eq.s32.totalorder %s20, 1
      %p52 = por %p50, %p51
      %p53 = scmp.ne.s32.totalorder %s42, %s43
      %p54 = scmp.eq.s32.totalorder %s20, 0
      %p55 = por %p53, %p54
      %p56 = scmp.ne.s32.totalorder %s42, %s43
      %p57 = scmp.eq.s32.totalorder %s21, 1
      %p58 = por %p56, %p57
      %p60 = scmp.ne.s32.totalorder %s43, %s59
      %p61 = scmp.eq.s32.totalorder %s21, 0
      %p62 = por %p60, %p61
      %s63 = ssub.s32 %s22, %s34
      %p64 = scmp.eq.s32.totalorder %s63, 0
      %s66 = sadd.s32 %s65, 1
      %s67 = scalar_select %p64, %s65, %s66
      %p70 = pneg %p64
      %p71 = scmp.eq.s32.totalorder %s15, 1
      %p72 = por %p70, %p71
      %p73 = scmp.ne.s32.totalorder %s65, %s68
      %p74 = scmp.eq.s32.totalorder %s15, 0
      %p75 = por %p73, %p74
      %p76 = scmp.ne.s32.totalorder %s65, %s68
      %p77 = scmp.eq.s32.totalorder %s20, 1
      %p78 = por %p76, %p77
      %p79 = scmp.ne.s32.totalorder %s68, %s69
      %p80 = scmp.eq.s32.totalorder %s20, 0
      %p81 = por %p79, %p80
      %p82 = scmp.ne.s32.totalorder %s68, %s69
      %p83 = scmp.eq.s32.totalorder %s21, 1
      %p84 = por %p82, %p83
      %p86 = scmp.ne.s32.totalorder %s69, %s85
      %p87 = scmp.eq.s32.totalorder %s21, 0
      %p88 = por %p86, %p87
      %s89 = ssub.s32 %s23, %s30
      %p90 = scmp.eq.s32.totalorder %s89, 0
      %s92 = sadd.s32 %s91, 1
      %s93 = scalar_select %p90, %s91, %s92
      %p96 = pneg %p90
      %p97 = scmp.eq.s32.totalorder %s15, 1
      %p98 = por %p96, %p97
      %p99 = scmp.ne.s32.totalorder %s91, %s94
      %p100 = scmp.eq.s32.totalorder %s15, 0
      %p101 = por %p99, %p100
      %p102 = scmp.ne.s32.totalorder %s91, %s94
      %p103 = scmp.eq.s32.totalorder %s20, 1
      %p104 = por %p102, %p103
      %p105 = scmp.ne.s32.totalorder %s94, %s95
      %p106 = scmp.eq.s32.totalorder %s20, 0
      %p107 = por %p105, %p106
      %p108 = scmp.ne.s32.totalorder %s94, %s95
      %p109 = scmp.eq.s32.totalorder %s21, 1
      %p110 = por %p108, %p109
      %p112 = scmp.ne.s32.totalorder %s95, %s111
      %p113 = scmp.eq.s32.totalorder %s21, 0
      %p114 = por %p112, %p113
      %s115 = ssub.s32 %s22, %s34
      %s116 = ssub.s32 %s23, %s30
      %s117 = sor.u32 %s115, %s116
      %p118 = scmp.eq.s32.totalorder %s117, 0
      %s120 = sadd.s32 %s119, 1
      %s121 = scalar_select %p118, %s119, %s120
      %p124 = pneg %p118
      %p125 = scmp.eq.s32.totalorder %s15, 1
      %p126 = por %p124, %p125
      %p127 = scmp.ne.s32.totalorder %s119, %s122
      %p128 = scmp.eq.s32.totalorder %s15, 0
      %p129 = por %p127, %p128
      %p130 = scmp.ne.s32.totalorder %s119, %s122
      %p131 = scmp.eq.s32.totalorder %s20, 1
      %p132 = por %p130, %p131
      %p133 = scmp.ne.s32.totalorder %s122, %s123
      %p134 = scmp.eq.s32.totalorder %s20, 0
      %p135 = por %p133, %p134
      %p136 = scmp.ne.s32.totalorder %s122, %s123
      %p137 = scmp.eq.s32.totalorder %s21, 1
      %p138 = por %p136, %p137
      %p140 = scmp.ne.s32.totalorder %s123, %s139
      %p141 = scmp.eq.s32.totalorder %s21, 0
      %p142 = por %p140, %p141
      %p143 = scmp.le.s32.totalorder 1, %s15
      %p144 = scmp.lt.s32.totalorder %s15, 3
      %p145 = pnand %p143, %p144
      %p146 = pneg %p145
      // Predicated region
      $region9: #{tpu_custom_call.1} parent=5 // pred_check
        _
      $region10: #{tpu_custom_call.1} parent=5 // pred_check_branch
        %148 = sbr.rel (%p145) target = $region12
      $region11: #{tpu_custom_call.1} parent=5 // pred_region
        %s149 = ssub.s32 %s15, 1
        // Predicated region
        $region13: #{tpu_custom_call.1} parent=11 // pred_check
          %p150 = pneg %p107
        $region14: #{tpu_custom_call.1} parent=11 // pred_check_branch
          %152 = sbr.rel (%p150) target = $region16
        $region15: #{tpu_custom_call.1} parent=11 // pred_region
          %s153 = smul.u32 2, %s25
          %p154 = scmp.lt.s32.totalorder %s153, 1
          %s155 = scalar_select %p154, %s153, 1
          %s156 = smul.addr %s155, 4
          %s157 = scalar_lea.vmem %s2, %s156
          %s158 = smul.u32 2, %s25
        $region16: #{tpu_custom_call.1} parent=11 // pred_fallthru
          _
      $region12: #{tpu_custom_call.1} parent=5 // pred_fallthru
        _
      %p159 = scmp.lt.s32.totalorder %s15, 2
      // Predicated region
      $region17: #{tpu_custom_call.1} parent=5 // pred_check
        %p160 = pneg %p159
      $region18: #{tpu_custom_call.1} parent=5 // pred_check_branch
        %162 = sbr.rel (%p160) target = $region20
      $region19: #{tpu_custom_call.1} parent=5 // pred_region
        // Predicated region
        $region21: #{tpu_custom_call.1} parent=19 // pred_check
          %p163 = pneg %p49
        $region22: #{tpu_custom_call.1} parent=19 // pred_check_branch
          %165 = sbr.rel (%p163) target = $region24
        $region23: #{tpu_custom_call.1} parent=19 // pred_region
          %s166 = sand.u32 %s39, 1
          %s167 = scalar_lea.sflag [#allocation3], %s166
          %s168 = sand.u32 %s39, 1
          %s169 = smul.addr %s168, 32
          %s170 = scalar_lea.vmem [#allocation2], %s169
          %s171 = smul.u32 2, %s22
          %s172 = smul.u32 2, %s23
          %s174 = ssub.s32 512, 512
          %175 = vsyncadd %s167, %s174
          %s176 = smul.addr %s171, 2
          %s177 = sadd.s32 %s172, %s176
          %s178 = smul.addr %s177, 128
          %s179 = scalar_lea.hbm %s0, %s178
          %s180 = sshll.u32 %s170, 4
          %s181 = int_to_ptr.vmem [resolvable:$true] %s180
          %186 = dma.hbm_to_vmem [thread:$0]  %s179, 512, %s181, %s167, 256, 256, 16
        $region24: #{tpu_custom_call.1} parent=19 // pred_fallthru
          _
        // Predicated region
        $region25: #{tpu_custom_call.1} parent=19 // pred_check
          %p187 = pneg %p75
        $region26: #{tpu_custom_call.1} parent=19 // pred_check_branch
          %189 = sbr.rel (%p187) target = $region28
        $region27: #{tpu_custom_call.1} parent=19 // pred_region
          %s190 = smul.u32 2, %s22
          %p191 = scmp.lt.s32.totalorder %s190, 3
          %s192 = scalar_select %p191, %s190, 3
          %s193 = smul.addr %s192, 8
          %s194 = scalar_lea.vmem %s1, %s193
          %s195 = smul.u32 2, %s22
        $region28: #{tpu_custom_call.1} parent=19 // pred_fallthru
          _
      $region20: #{tpu_custom_call.1} parent=5 // pred_fallthru
        _
      %p196 = scmp.le.s32.totalorder 1, %s15
      %p197 = scmp.lt.s32.totalorder %s15, 3
      %p198 = pnand %p196, %p197
      %p199 = pneg %p198
      // Predicated region
      $region29: #{tpu_custom_call.1} parent=5 // pred_check
        _
      $region30: #{tpu_custom_call.1} parent=5 // pred_check_branch
        %201 = sbr.rel (%p198) target = $region32
      $region31: #{tpu_custom_call.1} parent=5 // pred_region
        %s202 = ssub.s32 %s15, 1
        %s203 = sand.u32 %s42, 1
        %s204 = scalar_lea.sflag [#allocation3], %s203
        %s205 = sand.u32 %s42, 1
        %s206 = smul.addr %s205, 32
        %s207 = scalar_lea.vmem [#allocation2], %s206
        // Predicated region
        $region33: #{tpu_custom_call.1} parent=31 // pred_check
          %p208 = pneg %p55
        $region34: #{tpu_custom_call.1} parent=31 // pred_check_branch
          %210 = sbr.rel (%p208) target = $region36
        $region35: #{tpu_custom_call.1} parent=31 // pred_region
          %211 = dma.done %s204, 512
        $region36: #{tpu_custom_call.1} parent=31 // pred_fallthru
          _
        %s212 = sand.u32 %s42, 1
        %s213 = scalar_lea.sflag [#allocation3], %s212
        %s214 = sand.u32 %s42, 1
        %s215 = smul.addr %s214, 32
        %s216 = scalar_lea.vmem [#allocation2], %s215
        %p217 = pneg %p55
        %p218 = pneg %p52
        %s219 = smul.u32 2, %s24
        %p220 = scmp.lt.s32.totalorder %s219, 3
        %s221 = scalar_select %p220, %s219, 3
        %s222 = smul.addr %s221, 8
        %s223 = scalar_lea.vmem %s1, %s222
        %p224 = pneg %p81
        %p225 = pneg %p78
        %s226 = smul.u32 2, %s25
        %p227 = scmp.lt.s32.totalorder %s226, 1
        %s228 = scalar_select %p227, %s226, 1
        %s229 = smul.addr %s228, 4
        %s230 = scalar_lea.vmem %s2, %s229
        %p231 = pneg %p107
        %p232 = pneg %p104
        %p233 = pneg %p135
        %p234 = pneg %p132
        %s235 = sand.u32 %s122, 1
        %s236 = scalar_lea.sflag [#allocation4], %s235
        %s237 = sand.u32 %s122, 1
        %s238 = smul.addr %s237, 32
        %s239 = scalar_lea.vmem [#allocation5], %s238
        %s240 = smul.u32 2, %s24
        %s241 = smul.u32 2, %s25
        %s242 = smul.u32 2, %s24
        %p243 = scmp.lt.s32.totalorder %s242, 3
        %s244 = scalar_select %p243, %s242, 3
        %s245 = smul.addr %s244, 8
        %s246 = scalar_lea.vmem %s1, %s245
        %s247 = smul.u32 2, %s24
        %s248 = smul.u32 2, %s25
        %p249 = scmp.lt.s32.totalorder %s248, 1
        %s250 = scalar_select %p249, %s248, 1
        %s251 = smul.addr %s250, 4
        %s252 = scalar_lea.vmem %s2, %s251
        %s253 = smul.u32 2, %s25
        %s254 = smul.u32 2, %s24
        %s255 = smul.u32 2, %s25
        %v256 = vld [vmem:[%s246] sm:$0xff]
        %v257 = vld [vmem:[%s246 + $0x8] sm:$0xff]
        %v258 = vmul.f32 %v256, 0.25
        %v259 = vmul.f32 %v257, 0.25
        %v260 = vld [vmem:[%s252] sm:$0xff]
        %v261 = vld [vmem:[%s207] sm:$0xff]
        %v262 = vld [vmem:[%s207 + $0x8] sm:$0xff]
        %v263 = vld [vmem:[%s207 + $0x10] sm:$0xff]
        %v264 = vld [vmem:[%s207 + $0x18] sm:$0xff]
        %266 = vset.pattern.permute.xlu0 0
        %267 = vperm.xlu0 %266, %v258
        %v268 = vpop.permute.xlu0 %267
        %271 = vset.pattern.permute.xlu0 0
        %272 = vperm.xlu0 %271, %v259
        %v273 = vpop.permute.xlu0 %272
        %v276 = vlaneseq
        %v277 = vshrl.u32 %v276, 7
        %v278 = vsub.s32 0, %v277
        %v279 = vrot.slane %v260, %v278
        %v280 = vlaneseq
        %v281 = vshrl.u32 %v280, 7
        %v282 = vsub.s32 4, %v281
        %v283 = vrot.slane %v260, %v282
        %v286 = vlaneseq
        %v287 = vshrl.u32 %v286, 7
        %v288 = vsub.s32 0, %v287
        %v289 = vrot.slane %v279, %v288
        %v290 = vlaneseq
        %v291 = vshrl.u32 %v290, 7
        %v292 = vsub.s32 0, %v291
        %v293 = vrot.slane %v283, %v292
        %v294 = vmul.f32 %v268, %v289
        %v295 = vmul.f32 %v268, %v293
        %v296 = vmul.f32 %v273, %v289
        %v297 = vmul.f32 %v273, %v293
        %v298 = vadd.f32 %v261, %v294
        %v299 = vadd.f32 %v262, %v295
        %v300 = vadd.f32 %v263, %v296
        %v301 = vadd.f32 %v264, %v297
        %302 = vset.pattern.permute.xlu0 1
        %303 = vperm.xlu0 %302, %v258
        %v304 = vpop.permute.xlu0 %303
        %306 = vset.pattern.permute.xlu0 1
        %307 = vperm.xlu0 %306, %v259
        %v308 = vpop.permute.xlu0 %307
        %v310 = vlaneseq
        %v311 = vshrl.u32 %v310, 7
        %v312 = vsub.s32 1, %v311
        %v313 = vrot.slane %v260, %v312
        %v314 = vlaneseq
        %v315 = vshrl.u32 %v314, 7
        %v316 = vsub.s32 5, %v315
        %v317 = vrot.slane %v260, %v316
        %v320 = vlaneseq
        %v321 = vshrl.u32 %v320, 7
        %v322 = vsub.s32 1, %v321
        %v323 = vrot.slane %v313, %v322
        %v324 = vlaneseq
        %v325 = vshrl.u32 %v324, 7
        %v326 = vsub.s32 1, %v325
        %v327 = vrot.slane %v317, %v326
        %v328 = vmul.f32 %v304, %v323
        %v329 = vmul.f32 %v304, %v327
        %v330 = vmul.f32 %v308, %v323
        %v331 = vmul.f32 %v308, %v327
        %v332 = vadd.f32 %v298, %v328
        %v333 = vadd.f32 %v299, %v329
        %v334 = vadd.f32 %v300, %v330
        %v335 = vadd.f32 %v301, %v331
        %336 = vset.pattern.permute.xlu0 2
        %337 = vperm.xlu0 %336, %v258
        %v338 = vpop.permute.xlu0 %337
        %340 = vset.pattern.permute.xlu0 2
        %341 = vperm.xlu0 %340, %v259
        %v342 = vpop.permute.xlu0 %341
        %v344 = vlaneseq
        %v345 = vshrl.u32 %v344, 7
        %v346 = vsub.s32 2, %v345
        %v347 = vrot.slane %v260, %v346
        %v348 = vlaneseq
        %v349 = vshrl.u32 %v348, 7
        %v350 = vsub.s32 6, %v349
        %v351 = vrot.slane %v260, %v350
        %v354 = vlaneseq
        %v355 = vshrl.u32 %v354, 7
        %v356 = vsub.s32 2, %v355
        %v357 = vrot.slane %v347, %v356
        %v358 = vlaneseq
        %v359 = vshrl.u32 %v358, 7
        %v360 = vsub.s32 2, %v359
        %v361 = vrot.slane %v351, %v360
        %v362 = vmul.f32 %v338, %v357
        %v363 = vmul.f32 %v338, %v361
        %v364 = vmul.f32 %v342, %v357
        %v365 = vmul.f32 %v342, %v361
        %v366 = vadd.f32 %v332, %v362
        %v367 = vadd.f32 %v333, %v363
        %v368 = vadd.f32 %v334, %v364
        %v369 = vadd.f32 %v335, %v365
        %370 = vset.pattern.permute.xlu0 3
        %371 = vperm.xlu0 %370, %v258
        %v372 = vpop.permute.xlu0 %371
        %374 = vset.pattern.permute.xlu0 3
        %375 = vperm.xlu0 %374, %v259
        %v376 = vpop.permute.xlu0 %375
        %v378 = vlaneseq
        %v379 = vshrl.u32 %v378, 7
        %v380 = vsub.s32 3, %v379
        %v381 = vrot.slane %v260, %v380
        %v382 = vlaneseq
        %v383 = vshrl.u32 %v382, 7
        %v384 = vsub.s32 7, %v383
        %v385 = vrot.slane %v260, %v384
        %v388 = vlaneseq
        %v389 = vshrl.u32 %v388, 7
        %v390 = vsub.s32 3, %v389
        %v391 = vrot.slane %v381, %v390
        %v392 = vlaneseq
        %v393 = vshrl.u32 %v392, 7
        %v394 = vsub.s32 3, %v393
        %v395 = vrot.slane %v385, %v394
        %v396 = vmul.f32 %v372, %v391
        %v397 = vmul.f32 %v372, %v395
        %v398 = vmul.f32 %v376, %v391
        %v399 = vmul.f32 %v376, %v395
        %v400 = vadd.f32 %v366, %v396
        %v401 = vadd.f32 %v367, %v397
        %v402 = vadd.f32 %v368, %v398
        %v403 = vadd.f32 %v369, %v399
        %404 = vst [vmem:[%s239] sm:$0xff] %v400
        %405 = vst [vmem:[%s239 + $0x8] sm:$0xff] %v401
        %406 = vst [vmem:[%s239 + $0x10] sm:$0xff] %v402
        %407 = vst [vmem:[%s239 + $0x18] sm:$0xff] %v403
        %s408 = sand.u32 %s122, 1
        %s409 = scalar_lea.sflag [#allocation4], %s408
        %s410 = sand.u32 %s122, 1
        %s411 = smul.addr %s410, 32
        %s412 = scalar_lea.vmem [#allocation5], %s411
        // Predicated region
        $region37: #{tpu_custom_call.1} parent=31 // pred_check
          %p413 = pneg %p132
        $region38: #{tpu_custom_call.1} parent=31 // pred_check_branch
          %415 = sbr.rel (%p413) target = $region40
        $region39: #{tpu_custom_call.1} parent=31 // pred_region
          %s416 = smul.u32 2, %s24
          %s417 = smul.u32 2, %s25
          %s419 = ssub.s32 512, 512
          %420 = vsyncadd %s409, %s419
          %s421 = smul.addr %s416, 2
          %s422 = sadd.s32 %s417, %s421
          %s423 = smul.addr %s422, 128
          %s424 = scalar_lea.hbm %s3, %s423
          %s425 = sshll.u32 %s412, 4
          %s426 = int_to_ptr.vmem [resolvable:$true] %s425
          %431 = dma.vmem_to_hbm [thread:$0]  %s426, 512, %s424, %s409, 256, 256, 16
        $region40: #{tpu_custom_call.1} parent=31 // pred_fallthru
          _
      $region32: #{tpu_custom_call.1} parent=5 // pred_fallthru
        _
      %p432 = scmp.le.s32.totalorder 2, %s15
      // Predicated region
      $region41: #{tpu_custom_call.1} parent=5 // pred_check
        %p433 = pneg %p432
      $region42: #{tpu_custom_call.1} parent=5 // pred_check_branch
        %435 = sbr.rel (%p433) target = $region44
      $region43: #{tpu_custom_call.1} parent=5 // pred_region
        %s436 = ssub.s32 %s15, 2
        // Predicated region
        $region45: #{tpu_custom_call.1} parent=43 // pred_check
          %p437 = pneg %p138
        $region46: #{tpu_custom_call.1} parent=43 // pred_check_branch
          %439 = sbr.rel (%p437) target = $region48
        $region47: #{tpu_custom_call.1} parent=43 // pred_region
          %s440 = sand.u32 %s123, 1
          %s441 = scalar_lea.sflag [#allocation4], %s440
          %s442 = sand.u32 %s123, 1
          %s443 = smul.addr %s442, 32
          %s444 = scalar_lea.vmem [#allocation5], %s443
          %445 = dma.done %s441, 512
        $region48: #{tpu_custom_call.1} parent=43 // pred_fallthru
          _
      $region44: #{tpu_custom_call.1} parent=5 // pred_fallthru
        _
    $region6: #{tpu_custom_call.1} parent=1 // loop_footer
      %s19 = sadd.s32 1, %s15
    $region7: #{tpu_custom_call.1} parent=1 // loop_footer_branch
      %14 = sbr.rel target = $region3
    $region8: #{tpu_custom_call.1} parent=1 // loop_exit
      _
    %446 = vsyncpa [#allocation3], 1
    %s447 = scalar_lea.sflag [#allocation3], 1
    %448 = vsyncpa %s447, 1
    %449 = vsyncpa [#allocation4], 1
    %s450 = scalar_lea.sflag [#allocation4], 1
    %451 = vsyncpa %s450, 1

</llo_original>
